<compile_context>
chip_gen: v7x
topology: tpu7x:2x2x1
jax: 0.10.0
libtpu: 0.0.40
codegen_flags: <defaults>
</compile_context>

<pallas_src>
import functools

import jax
import jax.numpy as jnp
from jax.experimental import pallas as pl
from jax.experimental.pallas import tpu as pltpu

_MAX_BLOCK_ROWS = 8192


@functools.lru_cache(maxsize=None)
def _tpu_vmem_capacity_bytes():
    """Physical VMEM per TensorCore; conservative fallback if the query fails."""
    try:
        info = pltpu.get_tpu_info()
        cap = getattr(info, "vmem_capacity_bytes", None)
        if cap:
            return int(cap)
    except Exception:
        pass
    return 64 * 1024 * 1024  # v7x per-TC size: safe lower bound everywhere


def _vmem_limit_bytes():
    # Leave headroom for Mosaic internal scratch; 96 MiB on 128 MiB parts
    # (v5e/v6e), 48 MiB on 64 MiB parts (v7x).
    return min(int(_tpu_vmem_capacity_bytes() * 3 // 4), 96 * 1024 * 1024)


def _pick_block_rows(rows, C, dtype, mode):
    """Row-tile size: biggest that fits a generation-aware VMEM budget."""
    itemsize = jnp.dtype(dtype).itemsize
    align = 16 if itemsize < 4 else 8          # bf16 packs [16,128] per vreg
    # Per-row VMEM bytes: double-buffered input + output in the I/O dtype,
    # plus k f32 intermediates live in the kernel body (x upcast / centered /
    # out; adanorm keeps one more full-width temporary alive).
    k_scratch = 3 if mode == 'adanorm' else 2
    per_row = C * itemsize * 4 + k_scratch * C * 4
    budget = int(_vmem_limit_bytes() * 0.8)
    by_vmem = max((budget // per_row) // align * align, align)

    rows_aligned = pl.cdiv(rows, align) * align
    block_rows = min(by_vmem, _MAX_BLOCK_ROWS, rows_aligned)

    # Prefer >= 4 grid steps (2 TensorCores on v7x share the 'parallel' axis,
    # and each wants >= 2 steps to double-buffer) before giving up block size.
    while pl.cdiv(rows, block_rows) < 4 and block_rows >= 2 * align:
        block_rows = max(align, (block_rows // 2) // align * align)
    return block_rows


def _ln_kernel_plain(x_ref, o_ref, *, mode, eps, hidden, adanorm_scale):
    x = x_ref[...].astype(jnp.float32)                        # (block_rows, C)
    mean = jnp.mean(x, axis=-1, keepdims=True)
    centered = x - mean
    # Both reductions below consume `centered`; issued back-to-back so they
    # fuse into a single traversal (adanorm only needs the plain sum).
    sq_sum = jnp.sum(centered * centered, axis=-1, keepdims=True)
    if mode == 'adanorm':
        c_sum = jnp.sum(centered, axis=-1, keepdims=True)
    var = sq_sum / float(hidden - 1)                          # unbiased (torch.std)
    std = jnp.sqrt(var)
    inv = 1.0 / (std + eps)                                   # per-row reciprocal

    if mode == 'nowb':
        out = centered * inv
    elif mode == 'gradnorm':
        # output = input.detach() + input_norm  -> forward value: x + normed
        out = x + centered * inv
    elif mode == 'adanorm':
        mean2 = c_sum / float(hidden)                         # mean of centered
        gra_norm = (0.1 * (centered - mean2)) * inv           # .detach(): value identical
        out = (centered - centered * gra_norm) * (inv * adanorm_scale)
    else:
        raise ValueError(f"unsupported in-kernel mode: {mode}")

    o_ref[...] = out.astype(o_ref.dtype)


def _ln_kernel_affine(x_ref, w_ref, b_ref, o_ref, *, eps, hidden):
    x = x_ref[...].astype(jnp.float32)                        # (block_rows, C)
    mean = jnp.mean(x, axis=-1, keepdims=True)
    centered = x - mean
    var = jnp.sum(centered * centered, axis=-1, keepdims=True) / float(hidden - 1)
    std = jnp.sqrt(var)
    inv = 1.0 / (std + eps)
    w = w_ref[...].astype(jnp.float32)                        # (1, C) broadcasts
    b = b_ref[...].astype(jnp.float32)
    out = (centered * inv) * w + b
    o_ref[...] = out.astype(o_ref.dtype)


def layer_norm_pallas(x, weight=None, bias=None, *, mode='distillnorm',
                      eps=1e-5, adanorm_scale=1.0):
    """Pallas implementation of LayerNormImpl.forward for input of shape (T, B, C)."""
    if mode == 'no_norm':
        return x
    if mode == 'topk':
        # TODO(synk): 'topk' mode needs per-row order statistics; not implemented.
        raise NotImplementedError("topk mode not implemented in Pallas")

    T, B, C = x.shape
    rows = T * B
    x2 = x.reshape(rows, C)

    block_rows = _pick_block_rows(rows, C, x.dtype, mode)
    grid = (pl.cdiv(rows, block_rows),)      # partial tail block handled by Pallas

    cparams = pltpu.CompilerParams(
        dimension_semantics=("parallel",),
        vmem_limit_bytes=_vmem_limit_bytes(),
    )

    if mode == 'distillnorm':
        if weight is None:
            weight = jnp.ones((C,), x.dtype)
        if bias is None:
            bias = jnp.zeros((C,), x.dtype)
        kernel = functools.partial(_ln_kernel_affine, eps=eps, hidden=C)
        out = pl.pallas_call(
            kernel,
            out_shape=jax.ShapeDtypeStruct((rows, C), x.dtype),
            grid=grid,
            in_specs=[
                pl.BlockSpec((block_rows, C), lambda i: (i, 0)),
                pl.BlockSpec((1, C), lambda i: (0, 0)),   # constant block index:
                pl.BlockSpec((1, C), lambda i: (0, 0)),   # not re-DMA'd per step
            ],
            out_specs=pl.BlockSpec((block_rows, C), lambda i: (i, 0)),
            compiler_params=cparams,
        )(x2, weight.reshape(1, C), bias.reshape(1, C))
    else:
        # No weight/bias DMAs for modes that do not use them.
        kernel = functools.partial(_ln_kernel_plain, mode=mode, eps=eps,
                                   hidden=C, adanorm_scale=adanorm_scale)
        out = pl.pallas_call(
            kernel,
            out_shape=jax.ShapeDtypeStruct((rows, C), x.dtype),
            grid=grid,
            in_specs=[pl.BlockSpec((block_rows, C), lambda i: (i, 0))],
            out_specs=pl.BlockSpec((block_rows, C), lambda i: (i, 0)),
            compiler_params=cparams,
        )(x2)

    return out.reshape(T, B, C)


def _jax_reference(x, weight, bias, *, mode, eps=1e-5, adanorm_scale=1.0):
    x = x.astype(jnp.float32)
    mean = jnp.mean(x, axis=-1, keepdims=True)
    centered = x - mean
    C = x.shape[-1]
    std = jnp.sqrt(jnp.sum(centered * centered, -1, keepdims=True) / (C - 1))
    denom = std + eps
    if mode == 'nowb':
        return centered / denom
    if mode == 'distillnorm':
        return (centered / denom) * weight.astype(jnp.float32) + bias.astype(jnp.float32)
    if mode == 'gradnorm':
        return x + centered / denom
    if mode == 'adanorm':
        mean2 = jnp.mean(centered, -1, keepdims=True)
        gra = (0.1 * (centered - mean2)) / denom
        return ((centered - centered * gra) / denom) * adanorm_scale
    return x


if __name__ == "__main__":
    key = jax.random.PRNGKey(0)
    failures = []

    def run_checks(T, B, C, dtype=jnp.float32, atol=1e-5, rtol=1e-5,
                   adanorm_scale=1.0):
        k = jax.random.fold_in(key, T * 100000 + B * 1000 + C)
        x = jax.random.normal(k, (T, B, C), dtype=jnp.float32).astype(dtype)
        weight = jnp.ones((C,), dtype)
        bias = jnp.zeros((C,), dtype)   # reset_parameters(): weight=1, bias=0
        for mode in ('nowb', 'distillnorm', 'gradnorm', 'adanorm'):
            out = layer_norm_pallas(x, weight, bias, mode=mode, eps=1e-5,
                                    adanorm_scale=adanorm_scale)
            out = jax.block_until_ready(out).astype(jnp.float32)
            ref = _jax_reference(x, weight, bias, mode=mode, eps=1e-5,
                                 adanorm_scale=adanorm_scale)
            if not jnp.allclose(out, ref, atol=atol, rtol=rtol):
                failures.append((T, B, C, str(dtype), mode))
        # 'no_norm' passthrough
        out_id = jax.block_until_ready(layer_norm_pallas(x, mode='no_norm'))
        if not jnp.allclose(out_id, x):
            failures.append((T, B, C, str(dtype), 'no_norm'))

    # Small lane-dense shape, an odd row count that exercises the masked tail
    # block, and a bf16 run with a non-unit adanorm_scale.
    run_checks(8, 2, 128)
    run_checks(5, 3, 128)
    run_checks(4, 2, 256, dtype=jnp.bfloat16, atol=5e-2, rtol=5e-2,
               adanorm_scale=0.5)

    if not failures:
        print("KERNEL_OK")
    else:
        print("KERNEL_FAIL:", failures)
</pallas_src>

<mosaic_0001>
module attributes {stable_mosaic.version = 11 : i64} {
  func.func @_ln_kernel_plain(%arg0: i32, %arg1: memref<8x128xf32, #tpu.memory_space<vmem>>, %arg2: memref<8x128xf32, #tpu.memory_space<vmem>>) attributes {dimension_semantics = [#tpu.dimension_semantics<parallel>], iteration_bounds = array<i64: 2>, scalar_prefetch = 0 : i64, scratch_operands = 0 : i64, tpu.core_type = #tpu.core_type<tc>, window_params = [{transform_indices = @transform_0, window_bounds = array<i64: 8, 128>}, {transform_indices = @transform_1, window_bounds = array<i64: 8, 128>}]} {
    %c0 = arith.constant 0 : index
    %c0_0 = arith.constant 0 : index
    %0 = vector.load %arg1[%c0, %c0_0] : memref<8x128xf32, #tpu.memory_space<vmem>>, vector<8x128xf32>
    %cst = arith.constant dense<0.000000e+00> : vector<8xf32>
    %1 = vector.multi_reduction <add>, %0, %cst [1] : vector<8x128xf32> to vector<8xf32>
    %2 = vector.shape_cast %1 : vector<8xf32> to vector<8x1xf32>
    %cst_1 = arith.constant 1.280000e+02 : f32
    %3 = vector.broadcast %cst_1 : f32 to vector<8x1xf32>
    %4 = arith.divf %2, %3 : vector<8x1xf32>
    %5 = vector.broadcast %4 : vector<8x1xf32> to vector<8x128xf32>
    %6 = arith.subf %0, %5 : vector<8x128xf32>
    %7 = arith.mulf %6, %6 : vector<8x128xf32>
    %cst_2 = arith.constant dense<0.000000e+00> : vector<8xf32>
    %8 = vector.multi_reduction <add>, %7, %cst_2 [1] : vector<8x128xf32> to vector<8xf32>
    %9 = vector.shape_cast %8 : vector<8xf32> to vector<8x1xf32>
    %cst_3 = arith.constant 1.270000e+02 : f32
    %10 = vector.broadcast %cst_3 : f32 to vector<8x1xf32>
    %11 = arith.divf %9, %10 : vector<8x1xf32>
    %12 = math.sqrt %11 : vector<8x1xf32>
    %cst_4 = arith.constant 9.99999974E-6 : f32
    %13 = vector.broadcast %cst_4 : f32 to vector<8x1xf32>
    %14 = arith.addf %12, %13 : vector<8x1xf32>
    %cst_5 = arith.constant 1.000000e+00 : f32
    %15 = vector.broadcast %cst_5 : f32 to vector<8x1xf32>
    %16 = arith.divf %15, %14 : vector<8x1xf32>
    %17 = vector.broadcast %16 : vector<8x1xf32> to vector<8x128xf32>
    %18 = arith.mulf %6, %17 : vector<8x128xf32>
    %c0_6 = arith.constant 0 : index
    %c0_7 = arith.constant 0 : index
    %19 = vector.load %arg2[%c0_6, %c0_7] : memref<8x128xf32, #tpu.memory_space<vmem>>, vector<8x128xf32>
    tpu.vector_store %arg2[%c0_6, %c0_7], %18 {strides = array<i32>} : memref<8x128xf32, #tpu.memory_space<vmem>>, vector<8x128xf32>,
    return
  }
  func.func @transform_0(%arg0: i32) -> (i32, i32) {
    %c0_i32 = arith.constant 0 : i32
    %c0_i32_0 = arith.constant 0 : i32
    return %arg0, %c0_i32 : i32, i32
  }
  func.func @transform_1(%arg0: i32) -> (i32, i32) {
    %c0_i32 = arith.constant 0 : i32
    %c0_i32_0 = arith.constant 0 : i32
    return %arg0, %c0_i32 : i32, i32
  }
}

</mosaic_0001>

<llo_original>
// kernel: tpu_custom_call.1
$region0: #{tpu_custom_call.1}
  #allocation0 [shape = 'u32[]', space=smem, size = 0x4, offset = 0x4, fixed_abs, tag = 'smem constant byte address 0x4 - core index']
  #allocation1 [shape = 'u32[144,128]{1,0:T(1,128)}', space=vmem, size = 0x12000, scoped, tag = 'internal scratch']
  %s0 = inlined_call_operand.hbm [shape: f32[16,128], index: 0, kind: input, shape index: {}]
  %s1 = inlined_call_operand.hbm [shape: f32[16,128], index: 1, kind: output, shape index: {}]
  %s2 = sld [smem:[#allocation0]]
  $region41: #{tpu_custom_call.1} parent=0
    _
  %s4 = ssub.s32 1, %s2
  %s5 = scalar_select 0, %s4, %s2
  $region1: #{tpu_custom_call.1} parent=0
    #allocation2 [shape = 'u8[8192]{0}', space=vmem, size = 0x2000, scoped, tag = 'input window, operand 0']
    #allocation3 [shape = 's32[2]{0}', space=sflag, size = 0x8, scoped, tag = 'scoped memory for tpu_custom_call.1']
    #allocation4 [shape = 's32[2]{0}', space=sflag, size = 0x8, scoped, tag = 'scoped memory for tpu_custom_call.1']
    #allocation5 [shape = 'u8[8192]{0}', space=vmem, size = 0x2000, scoped, tag = 'output window, operand 0']
    %6 = vsyncpa [#allocation3], 0
    %s7 = scalar_lea.sflag [#allocation3], 1
    %8 = vsyncpa %s7, 0
    %9 = vsyncpa [#allocation4], 0
    %s10 = scalar_lea.sflag [#allocation4], 1
    %11 = vsyncpa %s10, 0
    loop: start=0, step=1, limit=4
    $region2: #{tpu_custom_call.1} parent=1 // loop_pre_header
      _
    $region3: #{tpu_custom_call.1} parent=1 // loop_header
      %s13 = sphi 0, %s17
      %p14 = scmp.ge.s32.totalorder %s13, 4
      %s23 = sphi 0, %s25
      %s26 = sphi 0, %s23
      %s27 = sphi 0, %s26
      %s43 = sphi 0, %s27
      %s49 = sphi 0, %s51
      %s52 = sphi 0, %s49
      %s53 = sphi 0, %s52
      %s69 = sphi 0, %s53
    $region4: #{tpu_custom_call.1} parent=1 // loop_header_branch
      %16 = sbr.rel (%p14) target = $region8
    $region5: #{tpu_custom_call.1} parent=1 // loop_body
      %s18 = ssub.s32 %s13, 1
      %s19 = ssub.s32 %s13, 2
      %s20 = sadd.s32 %s13, 1
      %s21 = ssub.s32 %s13, %s20
      %p22 = scmp.eq.s32.totalorder %s21, 0
      %s24 = sadd.s32 %s23, 1
      %s25 = scalar_select %p22, %s23, %s24
      %p28 = pneg %p22
      %p29 = scmp.eq.s32.totalorder %s13, 1
      %p30 = por %p28, %p29
      %p31 = scmp.ne.s32.totalorder %s23, %s26
      %p32 = scmp.eq.s32.totalorder %s13, 0
      %p33 = por %p31, %p32
      %p34 = scmp.ne.s32.totalorder %s23, %s26
      %p35 = scmp.eq.s32.totalorder %s18, 1
      %p36 = por %p34, %p35
      %p37 = scmp.ne.s32.totalorder %s26, %s27
      %p38 = scmp.eq.s32.totalorder %s18, 0
      %p39 = por %p37, %p38
      %p40 = scmp.ne.s32.totalorder %s26, %s27
      %p41 = scmp.eq.s32.totalorder %s19, 1
      %p42 = por %p40, %p41
      %p44 = scmp.ne.s32.totalorder %s27, %s43
      %p45 = scmp.eq.s32.totalorder %s19, 0
      %p46 = por %p44, %p45
      %s47 = ssub.s32 %s13, %s20
      %p48 = scmp.eq.s32.totalorder %s47, 0
      %s50 = sadd.s32 %s49, 1
      %s51 = scalar_select %p48, %s49, %s50
      %p54 = pneg %p48
      %p55 = scmp.eq.s32.totalorder %s13, 1
      %p56 = por %p54, %p55
      %p57 = scmp.ne.s32.totalorder %s49, %s52
      %p58 = scmp.eq.s32.totalorder %s13, 0
      %p59 = por %p57, %p58
      %p60 = scmp.ne.s32.totalorder %s49, %s52
      %p61 = scmp.eq.s32.totalorder %s18, 1
      %p62 = por %p60, %p61
      %p63 = scmp.ne.s32.totalorder %s52, %s53
      %p64 = scmp.eq.s32.totalorder %s18, 0
      %p65 = por %p63, %p64
      %p66 = scmp.ne.s32.totalorder %s52, %s53
      %p67 = scmp.eq.s32.totalorder %s19, 1
      %p68 = por %p66, %p67
      %p70 = scmp.ne.s32.totalorder %s53, %s69
      %p71 = scmp.eq.s32.totalorder %s19, 0
      %p72 = por %p70, %p71
      %p73 = scmp.le.s32.totalorder 1, %s13
      %p74 = scmp.lt.s32.totalorder %s13, 3
      %p75 = pnand %p73, %p74
      %p76 = pneg %p75
      // Predicated region
      $region9: #{tpu_custom_call.1} parent=5 // pred_check
        _
      $region10: #{tpu_custom_call.1} parent=5 // pred_check_branch
        %78 = sbr.rel (%p75) target = $region12
      $region11: #{tpu_custom_call.1} parent=5 // pred_region
        %s79 = ssub.s32 %s13, 1
      $region12: #{tpu_custom_call.1} parent=5 // pred_fallthru
        _
      %p80 = scmp.lt.s32.totalorder %s13, 2
      // Predicated region
      $region13: #{tpu_custom_call.1} parent=5 // pred_check
        %p81 = pneg %p80
      $region14: #{tpu_custom_call.1} parent=5 // pred_check_branch
        %83 = sbr.rel (%p81) target = $region16
      $region15: #{tpu_custom_call.1} parent=5 // pred_region
        // Predicated region
        $region17: #{tpu_custom_call.1} parent=15 // pred_check
          %p84 = pneg %p33
        $region18: #{tpu_custom_call.1} parent=15 // pred_check_branch
          %86 = sbr.rel (%p84) target = $region20
        $region19: #{tpu_custom_call.1} parent=15 // pred_region
          %s87 = sand.u32 %s23, 1
          %s88 = scalar_lea.sflag [#allocation3], %s87
          %s89 = sand.u32 %s23, 1
          %s90 = smul.addr %s89, 8
          %s91 = scalar_lea.vmem [#allocation2], %s90
          %s93 = ssub.s32 128, 128
          %94 = vsyncadd %s88, %s93
          %s95 = smul.addr %s13, 128
          %s96 = scalar_lea.hbm %s0, %s95
          %s98 = sshll.u32 %s91, 4
          %s99 = int_to_ptr.vmem [resolvable:$true] %s98
          %101 = dma.hbm_to_vmem [thread:$0]  %s96, 128, %s99, %s88
        $region20: #{tpu_custom_call.1} parent=15 // pred_fallthru
          _
      $region16: #{tpu_custom_call.1} parent=5 // pred_fallthru
        _
      %p102 = scmp.le.s32.totalorder 1, %s13
      %p103 = scmp.lt.s32.totalorder %s13, 3
      %p104 = pnand %p102, %p103
      %p105 = pneg %p104
      // Predicated region
      $region21: #{tpu_custom_call.1} parent=5 // pred_check
        _
      $region22: #{tpu_custom_call.1} parent=5 // pred_check_branch
        %107 = sbr.rel (%p104) target = $region24
      $region23: #{tpu_custom_call.1} parent=5 // pred_region
        %s108 = ssub.s32 %s13, 1
        %s109 = sand.u32 %s26, 1
        %s110 = scalar_lea.sflag [#allocation3], %s109
        %s111 = sand.u32 %s26, 1
        %s112 = smul.addr %s111, 8
        %s113 = scalar_lea.vmem [#allocation2], %s112
        // Predicated region
        $region25: #{tpu_custom_call.1} parent=23 // pred_check
          %p114 = pneg %p39
        $region26: #{tpu_custom_call.1} parent=23 // pred_check_branch
          %116 = sbr.rel (%p114) target = $region28
        $region27: #{tpu_custom_call.1} parent=23 // pred_region
          %117 = dma.done %s110, 128
        $region28: #{tpu_custom_call.1} parent=23 // pred_fallthru
          _
        %s118 = sand.u32 %s26, 1
        %s119 = scalar_lea.sflag [#allocation3], %s118
        %s120 = sand.u32 %s26, 1
        %s121 = smul.addr %s120, 8
        %s122 = scalar_lea.vmem [#allocation2], %s121
        %p123 = pneg %p39
        %p124 = pneg %p36
        %p125 = pneg %p65
        %p126 = pneg %p62
        %s127 = sand.u32 %s52, 1
        %s128 = scalar_lea.sflag [#allocation4], %s127
        %s129 = sand.u32 %s52, 1
        %s130 = smul.addr %s129, 8
        %s131 = scalar_lea.vmem [#allocation5], %s130
        %v132 = vld [vmem:[%s113] sm:$0xff]
        %133 = vadd.xlane.f32.xlu0 %v132
        %v134 = vpop.xlane.xlu0 %133
        %v135 = vrcp.pop 128.0
        %v136 = vmul.f32 %v134, %v135
        %v137 = vsub.f32 %v132, %v136
        %v138 = vmul.f32 %v137, %v137
        %139 = vadd.xlane.f32.xlu0 %v138
        %v140 = vpop.xlane.xlu0 %139
        %v141 = vrcp.pop 127.0
        %v142 = vmul.f32 %v140, %v141
        %v143 = vrsqrt.pop %v142
        %v144 = vmul.f32 %v142, %v143
        %vm145 = vcmp.eq.f32.partialorder %v142, inf
        %v146 = vsel %vm145, %v142, %v144
        %vm147 = vcmp.eq.f32.partialorder %v142, 0.0
        %v148 = vand.u32 %v142, 2147483648
        %v149 = vsel %vm147, %v148, %v146
        %v150 = vadd.f32 %v149, 1e-05
        %v151 = vrcp.pop %v150
        %v152 = vmul.f32 1.0, %v151
        %v153 = vmul.f32 %v137, %v152
        %154 = vst [vmem:[%s131] sm:$0xff] %v153
        %s155 = sand.u32 %s52, 1
        %s156 = scalar_lea.sflag [#allocation4], %s155
        %s157 = sand.u32 %s52, 1
        %s158 = smul.addr %s157, 8
        %s159 = scalar_lea.vmem [#allocation5], %s158
        // Predicated region
        $region29: #{tpu_custom_call.1} parent=23 // pred_check
          %p160 = pneg %p62
        $region30: #{tpu_custom_call.1} parent=23 // pred_check_branch
          %162 = sbr.rel (%p160) target = $region32
        $region31: #{tpu_custom_call.1} parent=23 // pred_region
          %s164 = ssub.s32 128, 128
          %165 = vsyncadd %s156, %s164
          %s166 = smul.addr %s18, 128
          %s167 = scalar_lea.hbm %s1, %s166
          %s169 = sshll.u32 %s159, 4
          %s170 = int_to_ptr.vmem [resolvable:$true] %s169
          %172 = dma.vmem_to_hbm [thread:$0]  %s170, 128, %s167, %s156
        $region32: #{tpu_custom_call.1} parent=23 // pred_fallthru
          _
      $region24: #{tpu_custom_call.1} parent=5 // pred_fallthru
        _
      %p173 = scmp.le.s32.totalorder 2, %s13
      // Predicated region
      $region33: #{tpu_custom_call.1} parent=5 // pred_check
        %p174 = pneg %p173
      $region34: #{tpu_custom_call.1} parent=5 // pred_check_branch
        %176 = sbr.rel (%p174) target = $region36
      $region35: #{tpu_custom_call.1} parent=5 // pred_region
        %s177 = ssub.s32 %s13, 2
        // Predicated region
        $region37: #{tpu_custom_call.1} parent=35 // pred_check
          %p178 = pneg %p68
        $region38: #{tpu_custom_call.1} parent=35 // pred_check_branch
          %180 = sbr.rel (%p178) target = $region40
        $region39: #{tpu_custom_call.1} parent=35 // pred_region
          %s181 = sand.u32 %s53, 1
          %s182 = scalar_lea.sflag [#allocation4], %s181
          %s183 = sand.u32 %s53, 1
          %s184 = smul.addr %s183, 8
          %s185 = scalar_lea.vmem [#allocation5], %s184
          %186 = dma.done %s182, 128
        $region40: #{tpu_custom_call.1} parent=35 // pred_fallthru
          _
      $region36: #{tpu_custom_call.1} parent=5 // pred_fallthru
        _
    $region6: #{tpu_custom_call.1} parent=1 // loop_footer
      %s17 = sadd.s32 1, %s13
    $region7: #{tpu_custom_call.1} parent=1 // loop_footer_branch
      %12 = sbr.rel target = $region3
    $region8: #{tpu_custom_call.1} parent=1 // loop_exit
      _
    %187 = vsyncpa [#allocation3], 1
    %s188 = scalar_lea.sflag [#allocation3], 1
    %189 = vsyncpa %s188, 1
    %190 = vsyncpa [#allocation4], 1
    %s191 = scalar_lea.sflag [#allocation4], 1
    %192 = vsyncpa %s191, 1

</llo_original>
